<compile_context>
chip_gen: v5e
topology: v5e:2x2
jax: 0.10.0
libtpu: 0.0.40
codegen_flags: <defaults>
</compile_context>

<pallas_src>
import functools

import jax
import jax.numpy as jnp
from jax.experimental import pallas as pl
from jax.experimental.pallas import tpu as pltpu


def _round_up(x, m):
    return ((x + m - 1) // m) * m


def _pick_tile(M, max_t=1024):
    """Largest multiple-of-8 divisor of M that is <= max_t and, when possible,
    leaves >= 2 grid steps (v7x megacore).  Returns (TM, Mp) with Mp == M when a
    divisor exists (no jnp.pad copy)."""
    cap = min(max_t, M)
    if M >= 16:
        cap = min(cap, M // 2)
    cap = max(cap, 8)
    best = 0
    t = 8
    while t <= cap:
        if M % t == 0:
            best = t
        t += 8
    if best:
        return best, M
    TM = min(max_t, _round_up(M, 8))
    return TM, _round_up(M, TM)


# ----------------------------------------------------------------------------
# Pallas kernel 1: tiled matmul + bias + activation (stride-2 / 1x1 convs via im2col)
# ----------------------------------------------------------------------------
def _mm_bias_kernel(a_ref, w_ref, b_ref, o_ref, *, act):
    acc = jnp.dot(a_ref[...], w_ref[...], preferred_element_type=jnp.float32)
    acc = acc + b_ref[...]
    if act == "relu":
        acc = jnp.maximum(acc, 0.0)
    elif act == "leaky":
        acc = jnp.where(acc >= 0.0, acc, 0.01 * acc)
    o_ref[...] = acc.astype(o_ref.dtype)


def matmul_bias(a, w, b, act="none", out_dtype=jnp.bfloat16, tm=1024):
    M, K = a.shape
    N = w.shape[-1]
    TM, Mp = _pick_tile(M, tm)
    a = a.astype(jnp.bfloat16)
    if Mp != M:
        a = jnp.pad(a, ((0, Mp - M), (0, 0)))
    w = w.astype(jnp.bfloat16).reshape(K, N)
    b = b.astype(jnp.float32).reshape(1, N)
    out = pl.pallas_call(
        functools.partial(_mm_bias_kernel, act=act),
        out_shape=jax.ShapeDtypeStruct((Mp, N), out_dtype),
        grid=(Mp // TM,),
        in_specs=[
            pl.BlockSpec((TM, K), lambda i: (i, 0)),
            pl.BlockSpec((K, N), lambda i: (0, 0)),   # resident weights
            pl.BlockSpec((1, N), lambda i: (0, 0)),   # resident bias
        ],
        out_specs=pl.BlockSpec((TM, N), lambda i: (i, 0)),
        compiler_params=pltpu.CompilerParams(dimension_semantics=("parallel",)),
    )(a, w, b)
    return out[:M] if Mp != M else out


def im2col(x, ksize, stride, pad):
    # x: [B, H, W, C] (NHWC)
    B, H, W, C = x.shape
    xp = jnp.pad(x, ((0, 0), (pad, pad), (pad, pad), (0, 0)))
    Ho = (H + 2 * pad - ksize) // stride + 1
    Wo = (W + 2 * pad - ksize) // stride + 1
    cols = []
    for i in range(ksize):
        for j in range(ksize):
            cols.append(xp[:, i:i + stride * Ho:stride, j:j + stride * Wo:stride, :])
    return jnp.concatenate(cols, axis=-1), Ho, Wo


def conv2d(x, w, b, stride=1, act="relu", out_dtype=jnp.bfloat16):
    # Only used for the low-resolution stride-2 convs and 1x1 convs.
    # TODO(synk): replace by in-kernel shifted-tap accumulation (halo row blocks)
    #             to remove the remaining 9x read inflation at 1/2..1/8 resolution.
    k = w.shape[0]
    cout = w.shape[-1]
    pad = k // 2
    x = x.astype(jnp.bfloat16)
    patches, Ho, Wo = im2col(x, k, stride, pad)
    B = x.shape[0]
    a = patches.reshape(B * Ho * Wo, -1)
    out = matmul_bias(a, w.reshape(-1, cout), b, act=act, out_dtype=out_dtype)
    return out.reshape(B, Ho, Wo, cout)


# ----------------------------------------------------------------------------
# Pallas kernel 2: in-kernel shifted-tap 3x3 stride-1 conv (no im2col)
#   Used for c0 (full resolution) and, fused three-deep, for the refinement head.
# ----------------------------------------------------------------------------
def _conv3x3_to(src_ref, dst_ref, w_ref, b_ref, relu):
    # src_ref: (1, Ho+2, Wo+2, Cin) ref; dst_ref: (1, Ho, Wo, Cout) ref
    # w_ref: (3, 3, Cin, Cout) bf16; b_ref: (1, Cout) f32
    _, Ho, Wo, Cout = dst_ref.shape
    w_taps = [[w_ref[i, j] for j in range(3)] for i in range(3)]   # hoisted loads
    binit = jnp.zeros((Wo, Cout), jnp.float32) + b_ref[...]

    def row(h, carry):
        acc = binit
        for i in range(3):
            r = src_ref[0, h + i].astype(jnp.bfloat16)             # [Wo+2, Cin]
            for j in range(3):
                acc = acc + jnp.dot(r[j:j + Wo, :], w_taps[i][j],
                                    preferred_element_type=jnp.float32)
        if relu:
            acc = jnp.maximum(acc, 0.0)
        dst_ref[0, h] = acc.astype(dst_ref.dtype)
        return carry

    jax.lax.fori_loop(0, Ho, row, 0)


def _conv3x3_s1_kernel(x_ref, w_ref, b_ref, o_ref):
    _conv3x3_to(x_ref, o_ref, w_ref, b_ref, relu=True)


def conv3x3_stride1(x, w, b, out_dtype=jnp.bfloat16):
    # x: [B, H, W, Cin]; w: [3, 3, Cin, Cout]
    # TODO(synk): row-tile with halos (3 offset input specs) for very large images.
    B, H, W, Cin = x.shape
    Cout = w.shape[-1]
    xp = jnp.pad(x.astype(jnp.bfloat16), ((0, 0), (1, 1), (1, 1), (0, 0)))
    return pl.pallas_call(
        _conv3x3_s1_kernel,
        out_shape=jax.ShapeDtypeStruct((B, H, W, Cout), out_dtype),
        grid=(B,),
        in_specs=[
            pl.BlockSpec((1, H + 2, W + 2, Cin), lambda i: (i, 0, 0, 0)),
            pl.BlockSpec((3, 3, Cin, Cout), lambda i: (0, 0, 0, 0)),   # resident
            pl.BlockSpec((1, Cout), lambda i: (0, 0)),                 # resident
        ],
        out_specs=pl.BlockSpec((1, H, W, Cout), lambda i: (i, 0, 0, 0)),
        compiler_params=pltpu.CompilerParams(dimension_semantics=("parallel",)),
    )(xp, w.astype(jnp.bfloat16), b.astype(jnp.float32).reshape(1, Cout))


# ----------------------------------------------------------------------------
# Pallas kernel 3: fused refinement head
#   (ref_img ++ dnorm) -> conv3x3(4->8) relu -> conv3x3(8->8) relu -> conv3x3(8->1)
#   -> + dnorm.   All intermediates stay in VMEM scratch.
# ----------------------------------------------------------------------------
def _refine_kernel(x_ref, w0_ref, b0_ref, w1_ref, b1_ref, w2_ref, b2_ref,
                   out_ref, s0_ref, s1_ref):
    _, H, W, _ = out_ref.shape
    _conv3x3_to(x_ref, s0_ref, w0_ref, b0_ref, relu=True)     # (1, H+4, W+4, 8)
    _conv3x3_to(s0_ref, s1_ref, w1_ref, b1_ref, relu=True)    # (1, H+2, W+2, 8)

    w_taps = [[w2_ref[i, j] for j in range(3)] for i in range(3)]
    binit = jnp.zeros((W, 1), jnp.float32) + b2_ref[...]

    def row(h, carry):
        acc = binit
        for i in range(3):
            r = s1_ref[0, h + i]                               # [W+2, 8] bf16
            for j in range(3):
                acc = acc + jnp.dot(r[j:j + W, :], w_taps[i][j],
                                    preferred_element_type=jnp.float32)
        xr = x_ref[0, h + 3]                                   # [W+6, 4] f32
        dn = xr[3:3 + W, 3:4]                                  # dnorm channel, [W, 1]
        out_ref[0, h] = dn + acc
        return carry

    jax.lax.fori_loop(0, H, row, 0)


def refine_fused(x, w0, b0, w1, b1, w2, b2):
    # x: [B, H, W, 4] f32 = concat(ref_img, dnorm).  Returns dnorm + residual, [B,H,W].
    B, H, W, _ = x.shape
    xp = jnp.pad(x, ((0, 0), (3, 3), (3, 3), (0, 0)))
    out = pl.pallas_call(
        _refine_kernel,
        out_shape=jax.ShapeDtypeStruct((B, H, W, 1), jnp.float32),
        grid=(B,),
        in_specs=[
            pl.BlockSpec((1, H + 6, W + 6, 4), lambda i: (i, 0, 0, 0)),
            pl.BlockSpec(w0.shape, lambda i: (0, 0, 0, 0)),
            pl.BlockSpec((1, 8), lambda i: (0, 0)),
            pl.BlockSpec(w1.shape, lambda i: (0, 0, 0, 0)),
            pl.BlockSpec((1, 8), lambda i: (0, 0)),
            pl.BlockSpec(w2.shape, lambda i: (0, 0, 0, 0)),
            pl.BlockSpec((1, 1), lambda i: (0, 0)),
        ],
        out_specs=pl.BlockSpec((1, H, W, 1), lambda i: (i, 0, 0, 0)),
        scratch_shapes=[pltpu.VMEM((1, H + 4, W + 4, 8), jnp.bfloat16),
                        pltpu.VMEM((1, H + 2, W + 2, 8), jnp.bfloat16)],
        compiler_params=pltpu.CompilerParams(dimension_semantics=("parallel",)),
    )(xp,
      w0.astype(jnp.bfloat16), b0.astype(jnp.float32).reshape(1, 8),
      w1.astype(jnp.bfloat16), b1.astype(jnp.float32).reshape(1, 8),
      w2.astype(jnp.bfloat16), b2.astype(jnp.float32).reshape(1, 1))
    return out[..., 0]


# ----------------------------------------------------------------------------
# Pallas kernel 4: fused 1x1 "inner conv + skip add + output conv" of the FPN head
#   intra = x @ Wi + bi + skip ;  out = intra @ Wo + bo
# ----------------------------------------------------------------------------
def _fused_1x1_kernel(x_ref, s_ref, wi_ref, bi_ref, wo_ref, bo_ref, intra_ref, out_ref):
    inner = jnp.dot(x_ref[...], wi_ref[...], preferred_element_type=jnp.float32)
    inner = inner + bi_ref[...] + s_ref[...].astype(jnp.float32)
    intra_ref[...] = inner.astype(intra_ref.dtype)
    out = jnp.dot(inner.astype(jnp.bfloat16), wo_ref[...],
                  preferred_element_type=jnp.float32)
    out_ref[...] = (out + bo_ref[...]).astype(out_ref.dtype)


def fused_inner_output(x, skip, wi, bi, wo, bo, tm=1024):
    # x [B,H,W,Cin], skip [B,H,W,Cmid] -> (intra [B,H,W,Cmid], out [B,H,W,Cout]) bf16
    B, H, W, Cin = x.shape
    Cmid = wi.shape[-1]
    Cout = wo.shape[-1]
    M = B * H * W
    TM, Mp = _pick_tile(M, tm)
    xf = x.reshape(M, Cin).astype(jnp.bfloat16)
    sf = skip.reshape(M, Cmid).astype(jnp.bfloat16)
    if Mp != M:
        xf = jnp.pad(xf, ((0, Mp - M), (0, 0)))
        sf = jnp.pad(sf, ((0, Mp - M), (0, 0)))
    wi2 = wi.reshape(Cin, Cmid).astype(jnp.bfloat16)
    wo2 = wo.reshape(Cmid, Cout).astype(jnp.bfloat16)
    bi2 = bi.astype(jnp.float32).reshape(1, Cmid)
    bo2 = bo.astype(jnp.float32).reshape(1, Cout)
    intra, out = pl.pallas_call(
        _fused_1x1_kernel,
        out_shape=(jax.ShapeDtypeStruct((Mp, Cmid), jnp.bfloat16),
                   jax.ShapeDtypeStruct((Mp, Cout), jnp.bfloat16)),
        grid=(Mp // TM,),
        in_specs=[
            pl.BlockSpec((TM, Cin), lambda i: (i, 0)),
            pl.BlockSpec((TM, Cmid), lambda i: (i, 0)),
            pl.BlockSpec((Cin, Cmid), lambda i: (0, 0)),
            pl.BlockSpec((1, Cmid), lambda i: (0, 0)),
            pl.BlockSpec((Cmid, Cout), lambda i: (0, 0)),
            pl.BlockSpec((1, Cout), lambda i: (0, 0)),
        ],
        out_specs=(pl.BlockSpec((TM, Cmid), lambda i: (i, 0)),
                   pl.BlockSpec((TM, Cout), lambda i: (i, 0))),
        compiler_params=pltpu.CompilerParams(dimension_semantics=("parallel",)),
    )(xf, sf, wi2, bi2, wo2, bo2)
    if Mp != M:
        intra, out = intra[:M], out[:M]
    return intra.reshape(B, H, W, Cmid), out.reshape(B, H, W, Cout)


# ----------------------------------------------------------------------------
# Pallas kernel 5: patchmatch evaluation (pixel-tiled, channel-major, lane-dense)
#   per pixel: weighted channel correlation (views accumulated first, major-axis
#   channel reduction on the VPU), softmax over depth hypotheses, expected depth
#   + confidence.  The pixel axis P is the lane axis everywhere.
# ----------------------------------------------------------------------------
def _pm_eval_kernel(ref_ref, warped_ref, hypo_ref, wch_ref,
                    depth_ref, conf_ref, *, views):
    wch = wch_ref[...]                                   # [C, 1] f32
    ref_w = ref_ref[0].astype(jnp.float32) * wch         # [C, TP]
    wsum = warped_ref[0, 0].astype(jnp.float32)          # [C, D, TP]
    for v in range(1, views):
        wsum = wsum + warped_ref[0, v].astype(jnp.float32)
    # Channel reduction over the MAJOR axis -> pure VALU accumulation (no XLU reduce).
    score = jnp.sum(ref_w[:, None, :] * wsum, axis=0) * (1.0 / views)   # [D, TP]
    m = jnp.max(score, axis=0, keepdims=True)            # [1, TP]
    e = jnp.exp(score - m)
    inv = pl.reciprocal(jnp.sum(e, axis=0, keepdims=True), approx=True)
    prob = e * inv                                       # [D, TP]
    hypo = hypo_ref[0]                                   # [D, TP]
    depth_ref[0] = jnp.sum(prob * hypo, axis=0, keepdims=True)   # [1, TP]
    conf_ref[0] = jnp.max(prob, axis=0, keepdims=True)           # [1, TP]


def pm_eval(ref_cm, warped, hypos, wch, tp=1024):
    # ref_cm [B,C,P] bf16; warped [B,V,C,D,P] bf16; hypos [B,D,P] f32; wch [C] f32
    # tp default 1024 keeps v7x (64 MiB VMEM, 2 TCs) safe; v5e/v6e may use 2048.
    B, C, P = ref_cm.shape
    V, D = warped.shape[1], warped.shape[3]
    if P <= tp:
        TP, Pp = P, P
    else:
        assert tp % 128 == 0, "pixel tile must be a multiple of 128 when tiling"
        TP = tp
        Pp = _round_up(P, TP)
    assert TP == Pp or TP % 128 == 0
    if Pp != P:
        ref_cm = jnp.pad(ref_cm, ((0, 0), (0, 0), (0, Pp - P)))
        warped = jnp.pad(warped, ((0, 0),) * 4 + ((0, Pp - P),))
        hypos = jnp.pad(hypos, ((0, 0), (0, 0), (0, Pp - P)))
    n_steps = B * (Pp // TP)
    warped_spec = pl.BlockSpec((1, V, C, D, TP), lambda b, p: (b, 0, 0, 0, p))
    if n_steps >= 3:
        # Multi-MiB DMA against light VALU compute: hide latency with a 3rd buffer.
        warped_spec = pl.BlockSpec((1, V, C, D, TP), lambda b, p: (b, 0, 0, 0, p),
                                   pipeline_mode=pl.Buffered(3))
    kernel = functools.partial(_pm_eval_kernel, views=V)
    depth, conf = pl.pallas_call(
        kernel,
        out_shape=(jax.ShapeDtypeStruct((B, 1, Pp), jnp.float32),
                   jax.ShapeDtypeStruct((B, 1, Pp), jnp.float32)),
        grid=(B, Pp // TP),
        in_specs=[
            pl.BlockSpec((1, C, TP), lambda b, p: (b, 0, p)),
            warped_spec,
            pl.BlockSpec((1, D, TP), lambda b, p: (b, 0, p)),
            pl.BlockSpec((C, 1), lambda b, p: (0, 0)),        # resident weights
        ],
        out_specs=(pl.BlockSpec((1, 1, TP), lambda b, p: (b, 0, p)),
                   pl.BlockSpec((1, 1, TP), lambda b, p: (b, 0, p))),
        compiler_params=pltpu.CompilerParams(
            dimension_semantics=("parallel", "parallel")),
    )(ref_cm.astype(jnp.bfloat16), warped.astype(jnp.bfloat16),
      hypos.astype(jnp.float32), wch.astype(jnp.float32).reshape(C, 1))
    return depth[:, 0, :P], conf[:, 0, :P]


# ----------------------------------------------------------------------------
# JAX glue: differentiable homography warping (channel-major, per-view bf16).
# TODO(synk): fuse the bilinear gather into pm_eval (pl.ANY + manual DMA gather) to
#             eliminate the warped-tensor HBM roundtrip entirely.
# ----------------------------------------------------------------------------
def homography_warp_cm(src_feat_cm, src_proj, ref_proj, depth_hypos, H, W):
    # src_feat_cm [B,C,H*W]; projs [B,4,4]; depth_hypos [B,D,H*W] -> [B,C,D,H*W] bf16
    B, C, P = src_feat_cm.shape
    proj = src_proj @ jnp.linalg.inv(ref_proj)
    rot = proj[:, :3, :3]
    trans = proj[:, :3, 3]
    yy, xx = jnp.meshgrid(jnp.arange(H, dtype=jnp.float32),
                          jnp.arange(W, dtype=jnp.float32), indexing="ij")
    xyz = jnp.stack([xx.ravel(), yy.ravel(), jnp.ones(H * W, jnp.float32)], 0)  # [3,HW]
    rot_xyz = jnp.einsum("bij,jp->bip", rot, xyz)                               # [B,3,HW]
    proj_xyz = (rot_xyz[:, None, :, :] * depth_hypos[:, :, None, :]
                + trans[:, None, :, None])                                      # [B,D,3,HW]
    z = jnp.clip(proj_xyz[:, :, 2], 1e-6, None)
    px = proj_xyz[:, :, 0] / z
    py = proj_xyz[:, :, 1] / z

    x0 = jnp.floor(px)
    y0 = jnp.floor(py)
    x1 = x0 + 1.0
    y1 = y0 + 1.0
    wx1 = px - x0
    wy1 = py - y0
    wx0 = 1.0 - wx1
    wy0 = 1.0 - wy1

    def gather(featcm, xi, yi):
        valid = ((xi >= 0) & (xi <= W - 1) & (yi >= 0) & (yi <= H - 1)).astype(jnp.float32)
        xc = jnp.clip(xi, 0, W - 1).astype(jnp.int32)
        yc = jnp.clip(yi, 0, H - 1).astype(jnp.int32)
        vals = jnp.take(featcm, yc * W + xc, axis=1)        # [C, D, HW]
        return vals.astype(jnp.float32) * valid[None]

    def per_batch(featcm, x0b, x1b, y0b, y1b, wx0b, wx1b, wy0b, wy1b):
        out = (gather(featcm, x0b, y0b) * (wx0b * wy0b)[None]
               + gather(featcm, x1b, y0b) * (wx1b * wy0b)[None]
               + gather(featcm, x0b, y1b) * (wx0b * wy1b)[None]
               + gather(featcm, x1b, y1b) * (wx1b * wy1b)[None])
        return out.astype(jnp.bfloat16)                     # bf16 per view (no f32 stack)

    return jax.vmap(per_batch)(src_feat_cm, x0, x1, y0, y1, wx0, wx1, wy0, wy1)


# ----------------------------------------------------------------------------
# Depth hypothesis sampling
# ----------------------------------------------------------------------------
def init_inverse_depth_samples(depth_min, depth_max, num_depth, P):
    B = depth_min.shape[0]
    inv_min = 1.0 / depth_max
    inv_max = 1.0 / depth_min
    t = jnp.arange(num_depth, dtype=jnp.float32) / (num_depth - 1)
    inv = inv_max[:, None] + (inv_min - inv_max)[:, None] * t[None]
    depth = 1.0 / inv
    return jnp.broadcast_to(depth[:, :, None], (B, num_depth, P))


def perturb_depth_samples(cur_depth, depth_min, depth_max, num_depth, interval_scale):
    # cur_depth [B, P]
    inv_min = 1.0 / depth_max
    inv_max = 1.0 / depth_min
    inv_range = (inv_max - inv_min)[:, None, None]
    k = jnp.arange(num_depth, dtype=jnp.float32) - (num_depth - 1) / 2.0
    inv_cur = 1.0 / jnp.clip(cur_depth, 1e-6, None)
    inv = inv_cur[:, None, :] + k[None, :, None] * interval_scale * inv_range
    inv = jnp.clip(inv, inv_min[:, None, None], inv_max[:, None, None])
    return 1.0 / inv


# ----------------------------------------------------------------------------
# Parameters (deterministic synthetic init)
# ----------------------------------------------------------------------------
def init_params(key):
    specs = [("c0", 3, 3, 8), ("c1", 3, 8, 16), ("c2", 3, 16, 32), ("c3", 3, 32, 64),
             ("o3", 1, 64, 64), ("i2", 1, 32, 64), ("o2", 1, 64, 32),
             ("i1", 1, 16, 64), ("o1", 1, 64, 16),
             ("r0", 3, 4, 8), ("r1", 3, 8, 8), ("r2", 3, 8, 1)]
    keys = jax.random.split(key, len(specs) + 4)
    p = {}
    for idx, (name, k, cin, cout) in enumerate(specs):
        p[f"{name}_w"] = (jax.random.normal(keys[idx], (k, k, cin, cout), jnp.float32)
                          / jnp.sqrt(float(k * k * cin)))
        p[f"{name}_b"] = jnp.zeros((cout,), jnp.float32)
    G = 8
    for stage, C in ((3, 64), (2, 32), (1, 16)):
        wg = jax.random.normal(keys[len(specs) + stage], (G,), jnp.float32) * 0.5 + 1.0
        p[f"wch_{stage}"] = jnp.repeat(wg, C // G) / float(C // G)
    return p


# ----------------------------------------------------------------------------
# Full forward pass (PatchmatchNet, reduced)
# ----------------------------------------------------------------------------
HPARAMS = {
    "interval_scale": [0.005, 0.0125, 0.025],
    "propagation_range": [6, 4, 2],
    "iteration": [1, 2, 2],
    "num_sample": [8, 8, 16],
    "propagate_neighbors": [0, 8, 16],
    "evaluate_neighbors": [9, 9, 9],
}


def patchmatchnet_forward(params, imgs, proj_mats, depth_min, depth_max,
                          hints=None, validhints=None):
    B, N, _, H, W = imgs.shape
    imgs_nhwc = jnp.transpose(imgs.reshape(B * N, 3, H, W), (0, 2, 3, 1))

    # Feature pyramid: c0 = in-kernel shifted-tap conv (no im2col at full res),
    # stride-2 convs on the tiled bf16 matmul kernel, 1x1 heads fused.
    c0 = conv3x3_stride1(imgs_nhwc, params["c0_w"], params["c0_b"])     # full, 8ch
    c1 = conv2d(c0, params["c1_w"], params["c1_b"], 2, "relu")          # 1/2, 16ch
    c2 = conv2d(c1, params["c2_w"], params["c2_b"], 2, "relu")          # 1/4, 32ch
    c3 = conv2d(c2, params["c3_w"], params["c3_b"], 2, "relu")          # 1/8, 64ch

    f3 = conv2d(c3, params["o3_w"], params["o3_b"], 1, "none")          # stage3, 64ch
    up3 = jax.image.resize(c3, (B * N, H // 4, W // 4, 64), "bilinear")
    intra2, f2 = fused_inner_output(c2, up3,
                                    params["i2_w"], params["i2_b"],
                                    params["o2_w"], params["o2_b"])     # stage2, 32ch
    up2 = jax.image.resize(intra2, (B * N, H // 2, W // 2, 64), "bilinear")
    _, f1 = fused_inner_output(c1, up2,
                               params["i1_w"], params["i1_b"],
                               params["o1_w"], params["o1_b"])          # stage1, 16ch

    feats = {3: f3, 2: f2, 1: f1}
    num_sample = HPARAMS["num_sample"]
    iteration = HPARAMS["iteration"]
    interval_scale = HPARAMS["interval_scale"]

    depth = None
    conf = None
    depth_patchmatch = {}

    for stage in (3, 2, 1):
        feat = feats[stage]
        Hs, Ws, Cs = feat.shape[1:]
        P = Hs * Ws
        feat = feat.reshape(B, N, Hs, Ws, Cs)
        # Channel-major (pixel axis on lanes) layout for the patchmatch kernel.
        feat_cm = jnp.transpose(feat.reshape(B, N, P, Cs), (0, 1, 3, 2))   # [B,N,C,P]
        ref_cm = feat_cm[:, 0]                                             # [B,C,P]
        projs = proj_mats[f"stage_{stage}"]
        ref_proj = projs[:, 0]
        Dn = num_sample[stage - 1]
        iters = iteration[stage - 1]
        iscale = interval_scale[stage - 1]
        wch = params[f"wch_{stage}"]

        if depth is not None:
            depth = jax.image.resize(depth, (B, Hs, Ws), "bilinear")

        stage_depths = []
        for _ in range(iters):
            if depth is None:
                hypos = init_inverse_depth_samples(depth_min, depth_max, Dn, P)
            else:
                hypos = perturb_depth_samples(depth.reshape(B, P),
                                              depth_min, depth_max, Dn, iscale)
            warped = []
            for v in range(1, N):
                warped.append(homography_warp_cm(feat_cm[:, v], projs[:, v],
                                                 ref_proj, hypos, Hs, Ws))
            warped = jnp.stack(warped, axis=1)                # [B,V,C,D,P] bf16
            d_flat, c_flat = pm_eval(ref_cm, warped, hypos, wch)
            depth = d_flat.reshape(B, Hs, Ws)
            conf = c_flat.reshape(B, Hs, Ws)
            stage_depths.append(depth[:, None])               # [B,1,Hs,Ws]
        depth_patchmatch[f"stage_{stage}"] = stage_depths

    # Refinement: fused single-kernel conv chain (concat -> r0 -> r1 -> r2 -> +dnorm).
    depth_full = jax.image.resize(depth, (B, H, W), "bilinear")
    conf_full = jax.image.resize(conf, (B, H, W), "bilinear")
    dmin = depth_min[:, None, None]
    dmax = depth_max[:, None, None]
    dnorm = (depth_full - dmin) / (dmax - dmin)
    ref_img = imgs_nhwc.reshape(B, N, H, W, 3)[:, 0]
    x = jnp.concatenate([ref_img, dnorm[..., None]], axis=-1)            # [B,H,W,4]
    refined_norm = refine_fused(x,
                                params["r0_w"], params["r0_b"],
                                params["r1_w"], params["r1_b"],
                                params["r2_w"], params["r2_b"])          # [B,H,W] f32
    refined = refined_norm * (dmax - dmin) + dmin

    return {
        "refined_depth": {"stage_0": refined[:, None]},
        "depth_patchmatch": depth_patchmatch,
        "photometric_confidence": conf_full[:, None],
    }


class NetBuilder:
    def __init__(self, key):
        self.hparams = dict(HPARAMS)
        self.params = init_params(key)

    def __call__(self, batch):
        hints, validhints = None, None
        if "hints" in batch:
            hints = batch["hints"]
            validhints = (hints > 0).astype(jnp.float32)
        # TODO(synk): guided-hints modulation of the depth hypotheses is not implemented.
        return patchmatchnet_forward(self.params, batch["imgs"], batch["proj_matrices"],
                                     batch["depth_min"], batch["depth_max"],
                                     hints, validhints)


def make_proj_matrices(B, N, H, W):
    mats = {}
    f = float(W)
    for s in range(4):
        scale = 1.0 / (2 ** s)
        K = jnp.array([[f * scale, 0.0, (W * scale) / 2.0],
                       [0.0, f * scale, (H * scale) / 2.0],
                       [0.0, 0.0, 1.0]], jnp.float32)
        projs = []
        for v in range(N):
            R = jnp.eye(3, dtype=jnp.float32)
            t = jnp.array([0.15 * v, -0.05 * v, 0.0], jnp.float32)
            Pm = jnp.eye(4, dtype=jnp.float32)
            Pm = Pm.at[:3, :3].set(K @ R)
            Pm = Pm.at[:3, 3].set(K @ t)
            projs.append(Pm)
        stack = jnp.stack(projs, 0)
        mats[f"stage_{s}"] = jnp.broadcast_to(stack[None], (B, N, 4, 4))
    return mats


if __name__ == "__main__":
    key = jax.random.PRNGKey(0)
    kp, ki = jax.random.split(key)
    B, N, H, W = 2, 3, 32, 32
    imgs = jax.random.uniform(ki, (B, N, 3, H, W), jnp.float32)
    batch = {
        "imgs": imgs,
        "proj_matrices": make_proj_matrices(B, N, H, W),
        "depth_min": jnp.full((B,), 2.0, jnp.float32),
        "depth_max": jnp.full((B,), 8.0, jnp.float32),
    }
    net = NetBuilder(kp)
    out = net(batch)
    jax.tree_util.tree_map(jax.block_until_ready, out)
    assert out["refined_depth"]["stage_0"].shape == (B, 1, H, W)
    assert out["depth_patchmatch"]["stage_1"][0].shape == (B, 1, H // 2, W // 2)
    assert bool(jnp.all(jnp.isfinite(out["refined_depth"]["stage_0"])))
    print("KERNEL_OK")
</pallas_src>

<mosaic_0001>
module attributes {stable_mosaic.version = 11 : i64} {
  func.func @_conv3x3_s1_kernel(%arg0: i32, %arg1: memref<1x34x34x3xbf16, #tpu.memory_space<vmem>>, %arg2: memref<3x3x3x8xbf16, #tpu.memory_space<vmem>>, %arg3: memref<1x8xf32, #tpu.memory_space<vmem>>, %arg4: memref<1x32x32x8xbf16, #tpu.memory_space<vmem>>) attributes {dimension_semantics = [#tpu.dimension_semantics<parallel>], iteration_bounds = array<i64: 6>, scalar_prefetch = 0 : i64, scratch_operands = 0 : i64, tpu.core_type = #tpu.core_type<tc>, window_params = [{transform_indices = @transform_0, window_bounds = array<i64: 1, 34, 34, 3>}, {pipeline_mode = #tpu.pipeline_mode<synchronous>, transform_indices = @transform_1, window_bounds = array<i64: 3, 3, 3, 8>}, {pipeline_mode = #tpu.pipeline_mode<synchronous>, transform_indices = @transform_2, window_bounds = array<i64: 1, 8>}, {transform_indices = @transform_3, window_bounds = array<i64: 1, 32, 32, 8>}]} {
    %c0 = arith.constant 0 : index
    %c0_0 = arith.constant 0 : index
    %c0_1 = arith.constant 0 : index
    %c0_2 = arith.constant 0 : index
    %0 = vector.load %arg2[%c0, %c0_0, %c0_1, %c0_2] : memref<3x3x3x8xbf16, #tpu.memory_space<vmem>>, vector<1x1x3x8xbf16>
    %1 = vector.shape_cast %0 : vector<1x1x3x8xbf16> to vector<3x8xbf16>
    %c0_3 = arith.constant 0 : index
    %c1 = arith.constant 1 : index
    %c0_4 = arith.constant 0 : index
    %c0_5 = arith.constant 0 : index
    %2 = vector.load %arg2[%c0_3, %c1, %c0_4, %c0_5] : memref<3x3x3x8xbf16, #tpu.memory_space<vmem>>, vector<1x1x3x8xbf16>
    %3 = vector.shape_cast %2 : vector<1x1x3x8xbf16> to vector<3x8xbf16>
    %c0_6 = arith.constant 0 : index
    %c2 = arith.constant 2 : index
    %c0_7 = arith.constant 0 : index
    %c0_8 = arith.constant 0 : index
    %4 = vector.load %arg2[%c0_6, %c2, %c0_7, %c0_8] : memref<3x3x3x8xbf16, #tpu.memory_space<vmem>>, vector<1x1x3x8xbf16>
    %5 = vector.shape_cast %4 : vector<1x1x3x8xbf16> to vector<3x8xbf16>
    %c1_9 = arith.constant 1 : index
    %c0_10 = arith.constant 0 : index
    %c0_11 = arith.constant 0 : index
    %c0_12 = arith.constant 0 : index
    %6 = vector.load %arg2[%c1_9, %c0_10, %c0_11, %c0_12] : memref<3x3x3x8xbf16, #tpu.memory_space<vmem>>, vector<1x1x3x8xbf16>
    %7 = vector.shape_cast %6 : vector<1x1x3x8xbf16> to vector<3x8xbf16>
    %c1_13 = arith.constant 1 : index
    %c1_14 = arith.constant 1 : index
    %c0_15 = arith.constant 0 : index
    %c0_16 = arith.constant 0 : index
    %8 = vector.load %arg2[%c1_13, %c1_14, %c0_15, %c0_16] : memref<3x3x3x8xbf16, #tpu.memory_space<vmem>>, vector<1x1x3x8xbf16>
    %9 = vector.shape_cast %8 : vector<1x1x3x8xbf16> to vector<3x8xbf16>
    %c1_17 = arith.constant 1 : index
    %c2_18 = arith.constant 2 : index
    %c0_19 = arith.constant 0 : index
    %c0_20 = arith.constant 0 : index
    %10 = vector.load %arg2[%c1_17, %c2_18, %c0_19, %c0_20] : memref<3x3x3x8xbf16, #tpu.memory_space<vmem>>, vector<1x1x3x8xbf16>
    %11 = vector.shape_cast %10 : vector<1x1x3x8xbf16> to vector<3x8xbf16>
    %c2_21 = arith.constant 2 : index
    %c0_22 = arith.constant 0 : index
    %c0_23 = arith.constant 0 : index
    %c0_24 = arith.constant 0 : index
    %12 = vector.load %arg2[%c2_21, %c0_22, %c0_23, %c0_24] : memref<3x3x3x8xbf16, #tpu.memory_space<vmem>>, vector<1x1x3x8xbf16>
    %13 = vector.shape_cast %12 : vector<1x1x3x8xbf16> to vector<3x8xbf16>
    %c2_25 = arith.constant 2 : index
    %c1_26 = arith.constant 1 : index
    %c0_27 = arith.constant 0 : index
    %c0_28 = arith.constant 0 : index
    %14 = vector.load %arg2[%c2_25, %c1_26, %c0_27, %c0_28] : memref<3x3x3x8xbf16, #tpu.memory_space<vmem>>, vector<1x1x3x8xbf16>
    %15 = vector.shape_cast %14 : vector<1x1x3x8xbf16> to vector<3x8xbf16>
    %c2_29 = arith.constant 2 : index
    %c2_30 = arith.constant 2 : index
    %c0_31 = arith.constant 0 : index
    %c0_32 = arith.constant 0 : index
    %16 = vector.load %arg2[%c2_29, %c2_30, %c0_31, %c0_32] : memref<3x3x3x8xbf16, #tpu.memory_space<vmem>>, vector<1x1x3x8xbf16>
    %17 = vector.shape_cast %16 : vector<1x1x3x8xbf16> to vector<3x8xbf16>
    %cst = arith.constant 0.000000e+00 : f32
    %18 = vector.broadcast %cst : f32 to vector<32x8xf32>
    %c0_33 = arith.constant 0 : index
    %c0_34 = arith.constant 0 : index
    %19 = vector.load %arg3[%c0_33, %c0_34] : memref<1x8xf32, #tpu.memory_space<vmem>>, vector<1x8xf32>
    %20 = vector.broadcast %19 : vector<1x8xf32> to vector<32x8xf32>
    %21 = arith.addf %18, %20 : vector<32x8xf32>
    %c0_i32 = arith.constant 0 : i32
    %c32_i32 = arith.constant 32 : i32
    %22 = arith.addi %c0_i32, %c32_i32 : i32
    %c1_i32 = arith.constant 1 : i32
    scf.for %arg5 = %c0_i32 to %22 step %c1_i32  : i32 {
      %c0_i32_36 = arith.constant 0 : i32
      %23 = arith.addi %arg5, %c0_i32_36 : i32
      %c0_37 = arith.constant 0 : index
      %24 = arith.index_cast %23 : i32 to index
      %c0_38 = arith.constant 0 : index
      %c0_39 = arith.constant 0 : index
      %25 = vector.load %arg1[%c0_37, %24, %c0_38, %c0_39] : memref<1x34x34x3xbf16, #tpu.memory_space<vmem>>, vector<1x1x34x3xbf16>
      %26 = vector.shape_cast %25 : vector<1x1x34x3xbf16> to vector<34x3xbf16>
      %27 = vector.extract_strided_slice %26 {offsets = [0, 0], sizes = [32, 3], strides = [1, 1]} : vector<34x3xbf16> to vector<32x3xbf16>
      %cst_40 = arith.constant dense<0.000000e+00> : vector<32x8xf32>
      %28 = tpu.matmul %27, %1, %cst_40 {dimension_numbers = #tpu.dot_dimension_numbers<[1], [0], [0], [1], [0, 0, 1, 1], [], []>} : vector<32x3xbf16>, vector<3x8xbf16>, vector<32x8xf32> -> vector<32x8xf32>
      %29 = arith.addf %21, %28 : vector<32x8xf32>
      %30 = vector.extract_strided_slice %26 {offsets = [1, 0], sizes = [32, 3], strides = [1, 1]} : vector<34x3xbf16> to vector<32x3xbf16>
      %cst_41 = arith.constant dense<0.000000e+00> : vector<32x8xf32>
      %31 = tpu.matmul %30, %3, %cst_41 {dimension_numbers = #tpu.dot_dimension_numbers<[1], [0], [0], [1], [0, 0, 1, 1], [], []>} : vector<32x3xbf16>, vector<3x8xbf16>, vector<32x8xf32> -> vector<32x8xf32>
      %32 = arith.addf %29, %31 : vector<32x8xf32>
      %33 = vector.extract_strided_slice %26 {offsets = [2, 0], sizes = [32, 3], strides = [1, 1]} : vector<34x3xbf16> to vector<32x3xbf16>
      %cst_42 = arith.constant dense<0.000000e+00> : vector<32x8xf32>
      %34 = tpu.matmul %33, %5, %cst_42 {dimension_numbers = #tpu.dot_dimension_numbers<[1], [0], [0], [1], [0, 0, 1, 1], [], []>} : vector<32x3xbf16>, vector<3x8xbf16>, vector<32x8xf32> -> vector<32x8xf32>
      %35 = arith.addf %32, %34 : vector<32x8xf32>
      %c1_i32_43 = arith.constant 1 : i32
      %36 = arith.addi %arg5, %c1_i32_43 : i32
      %c0_44 = arith.constant 0 : index
      %37 = arith.index_cast %36 : i32 to index
      %c0_45 = arith.constant 0 : index
      %c0_46 = arith.constant 0 : index
      %38 = vector.load %arg1[%c0_44, %37, %c0_45, %c0_46] : memref<1x34x34x3xbf16, #tpu.memory_space<vmem>>, vector<1x1x34x3xbf16>
      %39 = vector.shape_cast %38 : vector<1x1x34x3xbf16> to vector<34x3xbf16>
      %40 = vector.extract_strided_slice %39 {offsets = [0, 0], sizes = [32, 3], strides = [1, 1]} : vector<34x3xbf16> to vector<32x3xbf16>
      %cst_47 = arith.constant dense<0.000000e+00> : vector<32x8xf32>
      %41 = tpu.matmul %40, %7, %cst_47 {dimension_numbers = #tpu.dot_dimension_numbers<[1], [0], [0], [1], [0, 0, 1, 1], [], []>} : vector<32x3xbf16>, vector<3x8xbf16>, vector<32x8xf32> -> vector<32x8xf32>
      %42 = arith.addf %35, %41 : vector<32x8xf32>
      %43 = vector.extract_strided_slice %39 {offsets = [1, 0], sizes = [32, 3], strides = [1, 1]} : vector<34x3xbf16> to vector<32x3xbf16>
      %cst_48 = arith.constant dense<0.000000e+00> : vector<32x8xf32>
      %44 = tpu.matmul %43, %9, %cst_48 {dimension_numbers = #tpu.dot_dimension_numbers<[1], [0], [0], [1], [0, 0, 1, 1], [], []>} : vector<32x3xbf16>, vector<3x8xbf16>, vector<32x8xf32> -> vector<32x8xf32>
      %45 = arith.addf %42, %44 : vector<32x8xf32>
      %46 = vector.extract_strided_slice %39 {offsets = [2, 0], sizes = [32, 3], strides = [1, 1]} : vector<34x3xbf16> to vector<32x3xbf16>
      %cst_49 = arith.constant dense<0.000000e+00> : vector<32x8xf32>
      %47 = tpu.matmul %46, %11, %cst_49 {dimension_numbers = #tpu.dot_dimension_numbers<[1], [0], [0], [1], [0, 0, 1, 1], [], []>} : vector<32x3xbf16>, vector<3x8xbf16>, vector<32x8xf32> -> vector<32x8xf32>
      %48 = arith.addf %45, %47 : vector<32x8xf32>
      %c2_i32 = arith.constant 2 : i32
      %49 = arith.addi %arg5, %c2_i32 : i32
      %c0_50 = arith.constant 0 : index
      %50 = arith.index_cast %49 : i32 to index
      %c0_51 = arith.constant 0 : index
      %c0_52 = arith.constant 0 : index
      %51 = vector.load %arg1[%c0_50, %50, %c0_51, %c0_52] : memref<1x34x34x3xbf16, #tpu.memory_space<vmem>>, vector<1x1x34x3xbf16>
      %52 = vector.shape_cast %51 : vector<1x1x34x3xbf16> to vector<34x3xbf16>
      %53 = vector.extract_strided_slice %52 {offsets = [0, 0], sizes = [32, 3], strides = [1, 1]} : vector<34x3xbf16> to vector<32x3xbf16>
      %cst_53 = arith.constant dense<0.000000e+00> : vector<32x8xf32>
      %54 = tpu.matmul %53, %13, %cst_53 {dimension_numbers = #tpu.dot_dimension_numbers<[1], [0], [0], [1], [0, 0, 1, 1], [], []>} : vector<32x3xbf16>, vector<3x8xbf16>, vector<32x8xf32> -> vector<32x8xf32>
      %55 = arith.addf %48, %54 : vector<32x8xf32>
      %56 = vector.extract_strided_slice %52 {offsets = [1, 0], sizes = [32, 3], strides = [1, 1]} : vector<34x3xbf16> to vector<32x3xbf16>
      %cst_54 = arith.constant dense<0.000000e+00> : vector<32x8xf32>
      %57 = tpu.matmul %56, %15, %cst_54 {dimension_numbers = #tpu.dot_dimension_numbers<[1], [0], [0], [1], [0, 0, 1, 1], [], []>} : vector<32x3xbf16>, vector<3x8xbf16>, vector<32x8xf32> -> vector<32x8xf32>
      %58 = arith.addf %55, %57 : vector<32x8xf32>
      %59 = vector.extract_strided_slice %52 {offsets = [2, 0], sizes = [32, 3], strides = [1, 1]} : vector<34x3xbf16> to vector<32x3xbf16>
      %cst_55 = arith.constant dense<0.000000e+00> : vector<32x8xf32>
      %60 = tpu.matmul %59, %17, %cst_55 {dimension_numbers = #tpu.dot_dimension_numbers<[1], [0], [0], [1], [0, 0, 1, 1], [], []>} : vector<32x3xbf16>, vector<3x8xbf16>, vector<32x8xf32> -> vector<32x8xf32>
      %61 = arith.addf %58, %60 : vector<32x8xf32>
      %cst_56 = arith.constant 0.000000e+00 : f32
      %62 = vector.broadcast %cst_56 : f32 to vector<32x8xf32>
      %63 = arith.maximumf %61, %62 : vector<32x8xf32>
      %64 = arith.truncf %63 : vector<32x8xf32> to vector<32x8xbf16>
      %c0_57 = arith.constant 0 : index
      %65 = arith.index_cast %arg5 : i32 to index
      %c0_58 = arith.constant 0 : index
      %c0_59 = arith.constant 0 : index
      %66 = vector.load %arg4[%c0_57, %65, %c0_58, %c0_59] : memref<1x32x32x8xbf16, #tpu.memory_space<vmem>>, vector<1x1x32x8xbf16>
      %67 = vector.shape_cast %66 : vector<1x1x32x8xbf16> to vector<32x8xbf16>
      %68 = vector.shape_cast %64 : vector<32x8xbf16> to vector<1x1x32x8xbf16>
      tpu.vector_store %arg4[%c0_57, %65, %c0_58, %c0_59], %68 {strides = array<i32>} : memref<1x32x32x8xbf16, #tpu.memory_space<vmem>>, vector<1x1x32x8xbf16>,
    }
    %c32_i32_35 = arith.constant 32 : i32
    return
  }
  func.func @transform_0(%arg0: i32) -> (i32, i32, i32, i32) {
    %c0_i32 = arith.constant 0 : i32
    %c0_i32_0 = arith.constant 0 : i32
    %c0_i32_1 = arith.constant 0 : i32
    %c0_i32_2 = arith.constant 0 : i32
    return %arg0, %c0_i32, %c0_i32_0, %c0_i32_1 : i32, i32, i32, i32
  }
  func.func @transform_1(%arg0: i32) -> (i32, i32, i32, i32) {
    %c0_i32 = arith.constant 0 : i32
    %c0_i32_0 = arith.constant 0 : i32
    %c0_i32_1 = arith.constant 0 : i32
    %c0_i32_2 = arith.constant 0 : i32
    %c0_i32_3 = arith.constant 0 : i32
    return %c0_i32, %c0_i32_0, %c0_i32_1, %c0_i32_2 : i32, i32, i32, i32
  }
  func.func @transform_2(%arg0: i32) -> (i32, i32) {
    %c0_i32 = arith.constant 0 : i32
    %c0_i32_0 = arith.constant 0 : i32
    %c0_i32_1 = arith.constant 0 : i32
    return %c0_i32, %c0_i32_0 : i32, i32
  }
  func.func @transform_3(%arg0: i32) -> (i32, i32, i32, i32) {
    %c0_i32 = arith.constant 0 : i32
    %c0_i32_0 = arith.constant 0 : i32
    %c0_i32_1 = arith.constant 0 : i32
    %c0_i32_2 = arith.constant 0 : i32
    return %arg0, %c0_i32, %c0_i32_0, %c0_i32_1 : i32, i32, i32, i32
  }
}

</mosaic_0001>

<llo_original>
// kernel: tpu_custom_call.1
$region0: #{tpu_custom_call.1}
  #allocation0 [shape = 'u32[]', space=smem, size = 0x4, offset = 0x4, fixed_abs, tag = 'smem constant byte address 0x4 - core index']
  #allocation1 [shape = 'u32[72,128]{1,0:T(1,128)}', space=vmem, size = 0x9000, scoped, tag = 'internal scratch']
  %s0 = inlined_call_operand.vmem [shape: bf16[6,34,34,3], index: 0, kind: input, shape index: {}]
  %s1 = inlined_call_operand.vmem [shape: bf16[3,3,3,8], index: 1, kind: input, shape index: {}]
  %s2 = inlined_call_operand.vmem [shape: f32[1,8], index: 2, kind: input, shape index: {}]
  %s3 = inlined_call_operand.vmem [shape: bf16[6,32,32,8], index: 3, kind: output, shape index: {}]
  %s4 = sld [smem:[#allocation0]]
  $region52: #{tpu_custom_call.1} parent=0
    _
  %s6 = ssub.s32 1, %s4
  %s7 = scalar_select 0, %s6, %s4
  loop: start=0, step=1, limit=8
  $region2: #{tpu_custom_call.1} parent=0 // loop_pre_header
    _
  $region3: #{tpu_custom_call.1} parent=0 // loop_header
    %s9 = sphi 0, %s13
    %p10 = scmp.ge.s32.totalorder %s9, 8
    %s19 = sphi 0, %s21
    %s22 = sphi 0, %s19
    %s23 = sphi 0, %s22
    %s39 = sphi 0, %s23
    %s43 = sphi 0, %s43
    %s45 = sphi 0, %s43
    %s46 = sphi 0, %s45
    %s60 = sphi 0, %s46
    %s64 = sphi 0, %s64
    %s66 = sphi 0, %s64
    %s67 = sphi 0, %s66
    %s81 = sphi 0, %s67
    %s87 = sphi 0, %s89
    %s90 = sphi 0, %s87
    %s91 = sphi 0, %s90
    %s107 = sphi 0, %s91
  $region4: #{tpu_custom_call.1} parent=0 // loop_header_branch
    %12 = sbr.rel (%p10) target = $region8
  $region5: #{tpu_custom_call.1} parent=0 // loop_body
    %s14 = ssub.s32 %s9, 1
    %s15 = ssub.s32 %s9, 2
    %s16 = sadd.s32 %s9, 1
    %s17 = ssub.s32 %s9, %s16
    %p18 = scmp.eq.s32.totalorder %s17, 0
    %s20 = sadd.s32 %s19, 1
    %s21 = scalar_select %p18, %s19, %s20
    %p24 = pneg %p18
    %p25 = scmp.eq.s32.totalorder %s9, 5
    %p26 = por %p24, %p25
    %p27 = scmp.ne.s32.totalorder %s19, %s22
    %p28 = scmp.eq.s32.totalorder %s9, 0
    %p29 = por %p27, %p28
    %p30 = scmp.ne.s32.totalorder %s19, %s22
    %p31 = scmp.eq.s32.totalorder %s14, 5
    %p32 = por %p30, %p31
    %p33 = scmp.ne.s32.totalorder %s22, %s23
    %p34 = scmp.eq.s32.totalorder %s14, 0
    %p35 = por %p33, %p34
    %p36 = scmp.ne.s32.totalorder %s22, %s23
    %p37 = scmp.eq.s32.totalorder %s15, 5
    %p38 = por %p36, %p37
    %p40 = scmp.ne.s32.totalorder %s23, %s39
    %p41 = scmp.eq.s32.totalorder %s15, 0
    %p42 = por %p40, %p41
    %s44 = sadd.s32 %s43, 1
    %p47 = scmp.eq.s32.totalorder %s9, 5
    %p48 = scmp.ne.s32.totalorder %s43, %s45
    %p49 = scmp.eq.s32.totalorder %s9, 0
    %p50 = por %p48, %p49
    %p51 = scmp.ne.s32.totalorder %s43, %s45
    %p52 = scmp.eq.s32.totalorder %s14, 5
    %p53 = por %p51, %p52
    %p54 = scmp.ne.s32.totalorder %s45, %s46
    %p55 = scmp.eq.s32.totalorder %s14, 0
    %p56 = por %p54, %p55
    %p57 = scmp.ne.s32.totalorder %s45, %s46
    %p58 = scmp.eq.s32.totalorder %s15, 5
    %p59 = por %p57, %p58
    %p61 = scmp.ne.s32.totalorder %s46, %s60
    %p62 = scmp.eq.s32.totalorder %s15, 0
    %p63 = por %p61, %p62
    %s65 = sadd.s32 %s64, 1
    %p68 = scmp.eq.s32.totalorder %s9, 5
    %p69 = scmp.ne.s32.totalorder %s64, %s66
    %p70 = scmp.eq.s32.totalorder %s9, 0
    %p71 = por %p69, %p70
    %p72 = scmp.ne.s32.totalorder %s64, %s66
    %p73 = scmp.eq.s32.totalorder %s14, 5
    %p74 = por %p72, %p73
    %p75 = scmp.ne.s32.totalorder %s66, %s67
    %p76 = scmp.eq.s32.totalorder %s14, 0
    %p77 = por %p75, %p76
    %p78 = scmp.ne.s32.totalorder %s66, %s67
    %p79 = scmp.eq.s32.totalorder %s15, 5
    %p80 = por %p78, %p79
    %p82 = scmp.ne.s32.totalorder %s67, %s81
    %p83 = scmp.eq.s32.totalorder %s15, 0
    %p84 = por %p82, %p83
    %s85 = ssub.s32 %s9, %s16
    %p86 = scmp.eq.s32.totalorder %s85, 0
    %s88 = sadd.s32 %s87, 1
    %s89 = scalar_select %p86, %s87, %s88
    %p92 = pneg %p86
    %p93 = scmp.eq.s32.totalorder %s9, 5
    %p94 = por %p92, %p93
    %p95 = scmp.ne.s32.totalorder %s87, %s90
    %p96 = scmp.eq.s32.totalorder %s9, 0
    %p97 = por %p95, %p96
    %p98 = scmp.ne.s32.totalorder %s87, %s90
    %p99 = scmp.eq.s32.totalorder %s14, 5
    %p100 = por %p98, %p99
    %p101 = scmp.ne.s32.totalorder %s90, %s91
    %p102 = scmp.eq.s32.totalorder %s14, 0
    %p103 = por %p101, %p102
    %p104 = scmp.ne.s32.totalorder %s90, %s91
    %p105 = scmp.eq.s32.totalorder %s15, 5
    %p106 = por %p104, %p105
    %p108 = scmp.ne.s32.totalorder %s91, %s107
    %p109 = scmp.eq.s32.totalorder %s15, 0
    %p110 = por %p108, %p109
    %p111 = scmp.le.s32.totalorder 1, %s9
    %p112 = scmp.lt.s32.totalorder %s9, 7
    %p113 = pnand %p111, %p112
    %p114 = pneg %p113
    // Predicated region
    $region9: #{tpu_custom_call.1} parent=5 // pred_check
      _
    $region10: #{tpu_custom_call.1} parent=5 // pred_check_branch
      %116 = sbr.rel (%p113) target = $region12
    $region11: #{tpu_custom_call.1} parent=5 // pred_region
      %s117 = ssub.s32 %s9, 1
      // Predicated region
      $region13: #{tpu_custom_call.1} parent=11 // pred_check
        %p118 = pneg %p56
      $region14: #{tpu_custom_call.1} parent=11 // pred_check_branch
        %120 = sbr.rel (%p118) target = $region16
      $region15: #{tpu_custom_call.1} parent=11 // pred_region
        _
      $region16: #{tpu_custom_call.1} parent=11 // pred_fallthru
        _
      // Predicated region
      $region17: #{tpu_custom_call.1} parent=11 // pred_check
        %p121 = pneg %p77
      $region18: #{tpu_custom_call.1} parent=11 // pred_check_branch
        %123 = sbr.rel (%p121) target = $region20
      $region19: #{tpu_custom_call.1} parent=11 // pred_region
        _
      $region20: #{tpu_custom_call.1} parent=11 // pred_fallthru
        _
    $region12: #{tpu_custom_call.1} parent=5 // pred_fallthru
      _
    %p124 = scmp.lt.s32.totalorder %s9, 6
    // Predicated region
    $region21: #{tpu_custom_call.1} parent=5 // pred_check
      %p125 = pneg %p124
    $region22: #{tpu_custom_call.1} parent=5 // pred_check_branch
      %127 = sbr.rel (%p125) target = $region24
    $region23: #{tpu_custom_call.1} parent=5 // pred_region
      // Predicated region
      $region25: #{tpu_custom_call.1} parent=23 // pred_check
        %p128 = pneg %p29
      $region26: #{tpu_custom_call.1} parent=23 // pred_check_branch
        %130 = sbr.rel (%p128) target = $region28
      $region27: #{tpu_custom_call.1} parent=23 // pred_region
        %p131 = scmp.lt.s32.totalorder %s9, 5
        %s132 = scalar_select %p131, %s9, 5
        %s133 = smul.addr %s132, 170
        %s134 = smul.addr %s133, 4
        %s135 = scalar_lea.vmem %s0, %s134
      $region28: #{tpu_custom_call.1} parent=23 // pred_fallthru
        _
    $region24: #{tpu_custom_call.1} parent=5 // pred_fallthru
      _
    %p136 = scmp.le.s32.totalorder 1, %s9
    %p137 = scmp.lt.s32.totalorder %s9, 7
    %p138 = pnand %p136, %p137
    %p139 = pneg %p138
    // Predicated region
    $region29: #{tpu_custom_call.1} parent=5 // pred_check
      _
    $region30: #{tpu_custom_call.1} parent=5 // pred_check_branch
      %141 = sbr.rel (%p138) target = $region32
    $region31: #{tpu_custom_call.1} parent=5 // pred_region
      %s142 = ssub.s32 %s9, 1
      %p143 = scmp.lt.s32.totalorder %s14, 5
      %s144 = scalar_select %p143, %s14, 5
      %s145 = smul.addr %s144, 170
      %s146 = smul.addr %s145, 4
      %s147 = scalar_lea.vmem %s0, %s146
      %p148 = pneg %p35
      %p149 = pneg %p32
      %p150 = pneg %p56
      %p151 = pneg %p53
      %p152 = pneg %p77
      %p153 = pneg %p74
      %p154 = pneg %p103
      %p155 = pneg %p100
      %p156 = scmp.lt.s32.totalorder %s14, 5
      %s157 = scalar_select %p156, %s14, 5
      %s158 = smul.addr %s157, 128
      %s159 = smul.addr %s158, 4
      %s160 = scalar_lea.vmem %s3, %s159
      %p161 = scmp.lt.s32.totalorder %s14, 5
      %s162 = scalar_select %p161, %s14, 5
      %s163 = smul.addr %s162, 170
      %s164 = smul.addr %s163, 4
      %s165 = scalar_lea.vmem %s0, %s164
      %p166 = scmp.lt.s32.totalorder %s14, 5
      %s167 = scalar_select %p166, %s14, 5
      %s168 = smul.addr %s167, 128
      %s169 = smul.addr %s168, 4
      %s170 = scalar_lea.vmem %s3, %s169
      %v172 = vld [vmem:[%s1] sm:$0x3]
      %s173 = scalar_lea.vmem %s1, 2
      %v174 = vld [vmem:[%s173] sm:$0x3]
      %s175 = scalar_lea.vmem %s1, 4
      %v176 = vld [vmem:[%s175] sm:$0x3]
      %s177 = scalar_lea.vmem %s1, 6
      %v178 = vld [vmem:[%s177] sm:$0x3]
      %s179 = scalar_lea.vmem %s1, 8
      %v180 = vld [vmem:[%s179] sm:$0x3]
      %s181 = scalar_lea.vmem %s1, 10
      %v182 = vld [vmem:[%s181] sm:$0x3]
      %s183 = scalar_lea.vmem %s1, 12
      %v184 = vld [vmem:[%s183] sm:$0x3]
      %s185 = scalar_lea.vmem %s1, 14
      %v186 = vld [vmem:[%s185] sm:$0x3]
      %s187 = scalar_lea.vmem %s1, 16
      %v188 = vld [vmem:[%s187] sm:$0x3]
      %v189 = vld [vmem:[%s2] sm:$0x1]
      %v191 = vperm.slane %v189, 0
      %v193 = vadd.f32 %v191, 0.0
      loop: start=0, step=1, limit=32
      $region33: #{tpu_custom_call.1} parent=31 // loop_pre_header
        _
      $region34: #{tpu_custom_call.1} parent=31 // loop_header
        %s195 = sphi 0, %s199
        %p196 = scmp.ge.s32.totalorder %s195, 32
      $region35: #{tpu_custom_call.1} parent=31 // loop_header_branch
        %198 = sbr.rel (%p196) target = $region39
      $region36: #{tpu_custom_call.1} parent=31 // loop_body
        %s200 = smul.u32 %s195, 5
        %s201 = smul.addr %s200, 4
        %s202 = scalar_lea.vmem %s165, %s201
        %v203 = vld [vmem:[%s202] sm:$0xf]
        %v204 = vld [vmem:[%s202 + $0x4] sm:$0xf]
        %v205 = vld [vmem:[%s202 + $0x8] sm:$0xf]
        %v206 = vld [vmem:[%s202 + $0xc] sm:$0xf]
        %v207 = vld [vmem:[%s202 + $0x10] sm:$0x1]
        %v212 = vunpack.c.l.b16 %v203
        %v213 = vunpack.c.l.b16 %v204
        %v214 = vunpack.c.l.b16 %v205
        %v215 = vunpack.c.l.b16 %v206
        %v216 = vpack.c.b16 %v213, %v212
        %v217 = vpack.c.b16 %v215, %v214
        %vm218 = vcmask 23552
        %v220 = vsel %vm218, %v216, 0
        %v223 = vsel %vm218, %v217, 0
        %vm225 = vcmask 1040384
        %vm226 = vcmask 1041408
        %v227 = vsel %vm225, 4294967295, 65535
        %v228 = vsel %vm226, %v227, 0
        %v230 = vand.u32 %v172, %v228
        %232 = vmatpush.bf16.msra.mxu0 0
        %233 = vmatpush.bf16.msra.mxu0 0
        %234 = vmatpush.bf16.msra.mxu0 0
        %235 = vmatpush.bf16.msra.mxu0 0
        %236 = vmatpush.bf16.msra.mxu0 0
        %237 = vmatpush.bf16.msra.mxu0 0
        %238 = vmatpush.bf16.msra.mxu0 0
        %239 = vmatpush.bf16.msra.mxu0 %v230
        %240 = vmatmul.bf16.gmra.mxu0 %v220
        %v241 = vpop.f32.mrf.mxu0
        %v242 = vadd.f32 0.0, %v241
        %v243 = vpop.f32.mrf.mxu0
        %v244 = vadd.f32 0.0, %v243
        %245 = vmatmul.bf16.gmra.mxu0 %v223
        %v246 = vpop.f32.mrf.mxu0
        %v247 = vadd.f32 0.0, %v246
        %v248 = vpop.f32.mrf.mxu0
        %v249 = vadd.f32 0.0, %v248
        %250 = vdwg.mxu0
        %v251 = vadd.f32 %v193, %v242
        %v252 = vadd.f32 %v193, %v244
        %v253 = vadd.f32 %v193, %v247
        %v254 = vadd.f32 %v193, %v249
        %v256 = vunpack.c.l.b16 %v207
        %v257 = vpack.c.b16 %v256, %v256
        %vm258 = vsmask.f32 7424
        %v259 = vshrl.u32 %v216, 16
        %v261 = vshll.u32 %v216, 16
        %v263 = vrot.slane %v261, 1
        %v264 = vor.u32 %v259, %v263
        %v265 = vshll.u32 %v217, 16
        %v267 = vrot.slane %v265, 1
        %v268 = vsel %vm258, %v264, %v267
        %v269 = vshrl.u32 %v217, 16
        %v271 = vor.u32 %v269, %v267
        %v273 = vshll.u32 %v257, 16
        %v275 = vrot.slane %v273, 1
        %v276 = vsel %vm258, %v271, %v275
        %v278 = vsel %vm218, %v268, 0
        %v281 = vsel %vm218, %v276, 0
        %v284 = vand.u32 %v174, %v228
        %286 = vmatpush.bf16.msra.mxu0 0
        %287 = vmatpush.bf16.msra.mxu0 0
        %288 = vmatpush.bf16.msra.mxu0 0
        %289 = vmatpush.bf16.msra.mxu0 0
        %290 = vmatpush.bf16.msra.mxu0 0
        %291 = vmatpush.bf16.msra.mxu0 0
        %292 = vmatpush.bf16.msra.mxu0 0
        %293 = vmatpush.bf16.msra.mxu0 %v284
        %294 = vmatmul.bf16.gmra.mxu0 %v278
        %v295 = vpop.f32.mrf.mxu0
        %v296 = vadd.f32 0.0, %v295
        %v297 = vpop.f32.mrf.mxu0
        %v298 = vadd.f32 0.0, %v297
        %299 = vmatmul.bf16.gmra.mxu0 %v281
        %v300 = vpop.f32.mrf.mxu0
        %v301 = vadd.f32 0.0, %v300
        %v302 = vpop.f32.mrf.mxu0
        %v303 = vadd.f32 0.0, %v302
        %304 = vdwg.mxu0
        %v305 = vadd.f32 %v251, %v296
        %v306 = vadd.f32 %v252, %v298
        %v307 = vadd.f32 %v253, %v301
        %v308 = vadd.f32 %v254, %v303
        %vm309 = vcmask 1046528
        %v310 = vrot.slane %v216, 1
        %v311 = vrot.slane %v217, 1
        %v312 = vsel %vm309, %v310, %v311
        %v313 = vrot.slane %v257, 1
        %v314 = vsel %vm309, %v311, %v313
        %v316 = vsel %vm218, %v312, 0
        %v319 = vsel %vm218, %v314, 0
        %v322 = vand.u32 %v176, %v228
        %324 = vmatpush.bf16.msra.mxu0 0
        %325 = vmatpush.bf16.msra.mxu0 0
        %326 = vmatpush.bf16.msra.mxu0 0
        %327 = vmatpush.bf16.msra.mxu0 0
        %328 = vmatpush.bf16.msra.mxu0 0
        %329 = vmatpush.bf16.msra.mxu0 0
        %330 = vmatpush.bf16.msra.mxu0 0
        %331 = vmatpush.bf16.msra.mxu0 %v322
        %332 = vmatmul.bf16.gmra.mxu0 %v316
        %v333 = vpop.f32.mrf.mxu0
        %v334 = vadd.f32 0.0, %v333
        %v335 = vpop.f32.mrf.mxu0
        %v336 = vadd.f32 0.0, %v335
        %337 = vmatmul.bf16.gmra.mxu0 %v319
        %v338 = vpop.f32.mrf.mxu0
        %v339 = vadd.f32 0.0, %v338
        %v340 = vpop.f32.mrf.mxu0
        %v341 = vadd.f32 0.0, %v340
        %342 = vdwg.mxu0
        %v343 = vadd.f32 %v305, %v334
        %v344 = vadd.f32 %v306, %v336
        %v345 = vadd.f32 %v307, %v339
        %v346 = vadd.f32 %v308, %v341
        %s347 = sadd.s32 %s195, 1
        %s348 = smul.u32 %s347, 5
        %s349 = smul.addr %s348, 4
        %s350 = scalar_lea.vmem %s165, %s349
        %v351 = vld [vmem:[%s350] sm:$0xf]
        %v352 = vld [vmem:[%s350 + $0x4] sm:$0xf]
        %v353 = vld [vmem:[%s350 + $0x8] sm:$0xf]
        %v354 = vld [vmem:[%s350 + $0xc] sm:$0xf]
        %v355 = vld [vmem:[%s350 + $0x10] sm:$0x1]
        %v360 = vunpack.c.l.b16 %v351
        %v361 = vunpack.c.l.b16 %v352
        %v362 = vunpack.c.l.b16 %v353
        %v363 = vunpack.c.l.b16 %v354
        %v364 = vpack.c.b16 %v361, %v360
        %v365 = vpack.c.b16 %v363, %v362
        %v367 = vsel %vm218, %v364, 0
        %v370 = vsel %vm218, %v365, 0
        %v373 = vand.u32 %v178, %v228
        %375 = vmatpush.bf16.msra.mxu0 0
        %376 = vmatpush.bf16.msra.mxu0 0
        %377 = vmatpush.bf16.msra.mxu0 0
        %378 = vmatpush.bf16.msra.mxu0 0
        %379 = vmatpush.bf16.msra.mxu0 0
        %380 = vmatpush.bf16.msra.mxu0 0
        %381 = vmatpush.bf16.msra.mxu0 0
        %382 = vmatpush.bf16.msra.mxu0 %v373
        %383 = vmatmul.bf16.gmra.mxu0 %v367
        %v384 = vpop.f32.mrf.mxu0
        %v385 = vadd.f32 0.0, %v384
        %v386 = vpop.f32.mrf.mxu0
        %v387 = vadd.f32 0.0, %v386
        %388 = vmatmul.bf16.gmra.mxu0 %v370
        %v389 = vpop.f32.mrf.mxu0
        %v390 = vadd.f32 0.0, %v389
        %v391 = vpop.f32.mrf.mxu0
        %v392 = vadd.f32 0.0, %v391
        %393 = vdwg.mxu0
        %v394 = vadd.f32 %v343, %v385
        %v395 = vadd.f32 %v344, %v387
        %v396 = vadd.f32 %v345, %v390
        %v397 = vadd.f32 %v346, %v392
        %v399 = vunpack.c.l.b16 %v355
        %v400 = vpack.c.b16 %v399, %v399
        %v401 = vshrl.u32 %v364, 16
        %v403 = vshll.u32 %v364, 16
        %v405 = vrot.slane %v403, 1
        %v406 = vor.u32 %v401, %v405
        %v407 = vshll.u32 %v365, 16
        %v409 = vrot.slane %v407, 1
        %v410 = vsel %vm258, %v406, %v409
        %v411 = vshrl.u32 %v365, 16
        %v413 = vor.u32 %v411, %v409
        %v415 = vshll.u32 %v400, 16
        %v417 = vrot.slane %v415, 1
        %v418 = vsel %vm258, %v413, %v417
        %v420 = vsel %vm218, %v410, 0
        %v423 = vsel %vm218, %v418, 0
        %v426 = vand.u32 %v180, %v228
        %428 = vmatpush.bf16.msra.mxu0 0
        %429 = vmatpush.bf16.msra.mxu0 0
        %430 = vmatpush.bf16.msra.mxu0 0
        %431 = vmatpush.bf16.msra.mxu0 0
        %432 = vmatpush.bf16.msra.mxu0 0
        %433 = vmatpush.bf16.msra.mxu0 0
        %434 = vmatpush.bf16.msra.mxu0 0
        %435 = vmatpush.bf16.msra.mxu0 %v426
        %436 = vmatmul.bf16.gmra.mxu0 %v420
        %v437 = vpop.f32.mrf.mxu0
        %v438 = vadd.f32 0.0, %v437
        %v439 = vpop.f32.mrf.mxu0
        %v440 = vadd.f32 0.0, %v439
        %441 = vmatmul.bf16.gmra.mxu0 %v423
        %v442 = vpop.f32.mrf.mxu0
        %v443 = vadd.f32 0.0, %v442
        %v444 = vpop.f32.mrf.mxu0
        %v445 = vadd.f32 0.0, %v444
        %446 = vdwg.mxu0
        %v447 = vadd.f32 %v394, %v438
        %v448 = vadd.f32 %v395, %v440
        %v449 = vadd.f32 %v396, %v443
        %v450 = vadd.f32 %v397, %v445
        %v451 = vrot.slane %v364, 1
        %v452 = vrot.slane %v365, 1
        %v453 = vsel %vm309, %v451, %v452
        %v454 = vrot.slane %v400, 1
        %v455 = vsel %vm309, %v452, %v454
        %v457 = vsel %vm218, %v453, 0
        %v460 = vsel %vm218, %v455, 0
        %v463 = vand.u32 %v182, %v228
        %465 = vmatpush.bf16.msra.mxu0 0
        %466 = vmatpush.bf16.msra.mxu0 0
        %467 = vmatpush.bf16.msra.mxu0 0
        %468 = vmatpush.bf16.msra.mxu0 0
        %469 = vmatpush.bf16.msra.mxu0 0
        %470 = vmatpush.bf16.msra.mxu0 0
        %471 = vmatpush.bf16.msra.mxu0 0
        %472 = vmatpush.bf16.msra.mxu0 %v463
        %473 = vmatmul.bf16.gmra.mxu0 %v457
        %v474 = vpop.f32.mrf.mxu0
        %v475 = vadd.f32 0.0, %v474
        %v476 = vpop.f32.mrf.mxu0
        %v477 = vadd.f32 0.0, %v476
        %478 = vmatmul.bf16.gmra.mxu0 %v460
        %v479 = vpop.f32.mrf.mxu0
        %v480 = vadd.f32 0.0, %v479
        %v481 = vpop.f32.mrf.mxu0
        %v482 = vadd.f32 0.0, %v481
        %483 = vdwg.mxu0
        %v484 = vadd.f32 %v447, %v475
        %v485 = vadd.f32 %v448, %v477
        %v486 = vadd.f32 %v449, %v480
        %v487 = vadd.f32 %v450, %v482
        %s488 = sadd.s32 %s195, 2
        %s489 = smul.u32 %s488, 5
        %s490 = smul.addr %s489, 4
        %s491 = scalar_lea.vmem %s165, %s490
        %v492 = vld [vmem:[%s491] sm:$0xf]
        %v493 = vld [vmem:[%s491 + $0x4] sm:$0xf]
        %v494 = vld [vmem:[%s491 + $0x8] sm:$0xf]
        %v495 = vld [vmem:[%s491 + $0xc] sm:$0xf]
        %v496 = vld [vmem:[%s491 + $0x10] sm:$0x1]
        %v501 = vunpack.c.l.b16 %v492
        %v502 = vunpack.c.l.b16 %v493
        %v503 = vunpack.c.l.b16 %v494
        %v504 = vunpack.c.l.b16 %v495
        %v505 = vpack.c.b16 %v502, %v501
        %v506 = vpack.c.b16 %v504, %v503
        %v508 = vsel %vm218, %v505, 0
        %v511 = vsel %vm218, %v506, 0
        %v514 = vand.u32 %v184, %v228
        %516 = vmatpush.bf16.msra.mxu0 0
        %517 = vmatpush.bf16.msra.mxu0 0
        %518 = vmatpush.bf16.msra.mxu0 0
        %519 = vmatpush.bf16.msra.mxu0 0
        %520 = vmatpush.bf16.msra.mxu0 0
        %521 = vmatpush.bf16.msra.mxu0 0
        %522 = vmatpush.bf16.msra.mxu0 0
        %523 = vmatpush.bf16.msra.mxu0 %v514
        %524 = vmatmul.bf16.gmra.mxu0 %v508
        %v525 = vpop.f32.mrf.mxu0
        %v526 = vadd.f32 0.0, %v525
        %v527 = vpop.f32.mrf.mxu0
        %v528 = vadd.f32 0.0, %v527
        %529 = vmatmul.bf16.gmra.mxu0 %v511
        %v530 = vpop.f32.mrf.mxu0
        %v531 = vadd.f32 0.0, %v530
        %v532 = vpop.f32.mrf.mxu0
        %v533 = vadd.f32 0.0, %v532
        %534 = vdwg.mxu0
        %v535 = vadd.f32 %v484, %v526
        %v536 = vadd.f32 %v485, %v528
        %v537 = vadd.f32 %v486, %v531
        %v538 = vadd.f32 %v487, %v533
        %v540 = vunpack.c.l.b16 %v496
        %v541 = vpack.c.b16 %v540, %v540
        %v542 = vshrl.u32 %v505, 16
        %v544 = vshll.u32 %v505, 16
        %v546 = vrot.slane %v544, 1
        %v547 = vor.u32 %v542, %v546
        %v548 = vshll.u32 %v506, 16
        %v550 = vrot.slane %v548, 1
        %v551 = vsel %vm258, %v547, %v550
        %v552 = vshrl.u32 %v506, 16
        %v554 = vor.u32 %v552, %v550
        %v556 = vshll.u32 %v541, 16
        %v558 = vrot.slane %v556, 1
        %v559 = vsel %vm258, %v554, %v558
        %v561 = vsel %vm218, %v551, 0
        %v564 = vsel %vm218, %v559, 0
        %v567 = vand.u32 %v186, %v228
        %569 = vmatpush.bf16.msra.mxu0 0
        %570 = vmatpush.bf16.msra.mxu0 0
        %571 = vmatpush.bf16.msra.mxu0 0
        %572 = vmatpush.bf16.msra.mxu0 0
        %573 = vmatpush.bf16.msra.mxu0 0
        %574 = vmatpush.bf16.msra.mxu0 0
        %575 = vmatpush.bf16.msra.mxu0 0
        %576 = vmatpush.bf16.msra.mxu0 %v567
        %577 = vmatmul.bf16.gmra.mxu0 %v561
        %v578 = vpop.f32.mrf.mxu0
        %v579 = vadd.f32 0.0, %v578
        %v580 = vpop.f32.mrf.mxu0
        %v581 = vadd.f32 0.0, %v580
        %582 = vmatmul.bf16.gmra.mxu0 %v564
        %v583 = vpop.f32.mrf.mxu0
        %v584 = vadd.f32 0.0, %v583
        %v585 = vpop.f32.mrf.mxu0
        %v586 = vadd.f32 0.0, %v585
        %587 = vdwg.mxu0
        %v588 = vadd.f32 %v535, %v579
        %v589 = vadd.f32 %v536, %v581
        %v590 = vadd.f32 %v537, %v584
        %v591 = vadd.f32 %v538, %v586
        %v592 = vrot.slane %v505, 1
        %v593 = vrot.slane %v506, 1
        %v594 = vsel %vm309, %v592, %v593
        %v595 = vrot.slane %v541, 1
        %v596 = vsel %vm309, %v593, %v595
        %v598 = vsel %vm218, %v594, 0
        %v601 = vsel %vm218, %v596, 0
        %v604 = vand.u32 %v188, %v228
        %606 = vmatpush.bf16.msra.mxu0 0
        %607 = vmatpush.bf16.msra.mxu0 0
        %608 = vmatpush.bf16.msra.mxu0 0
        %609 = vmatpush.bf16.msra.mxu0 0
        %610 = vmatpush.bf16.msra.mxu0 0
        %611 = vmatpush.bf16.msra.mxu0 0
        %612 = vmatpush.bf16.msra.mxu0 0
        %613 = vmatpush.bf16.msra.mxu0 %v604
        %614 = vmatmul.bf16.gmra.mxu0 %v598
        %v615 = vpop.f32.mrf.mxu0
        %v616 = vadd.f32 0.0, %v615
        %v617 = vpop.f32.mrf.mxu0
        %v618 = vadd.f32 0.0, %v617
        %619 = vmatmul.bf16.gmra.mxu0 %v601
        %v620 = vpop.f32.mrf.mxu0
        %v621 = vadd.f32 0.0, %v620
        %v622 = vpop.f32.mrf.mxu0
        %v623 = vadd.f32 0.0, %v622
        %624 = vdwg.mxu0
        %v625 = vadd.f32 %v588, %v616
        %v626 = vadd.f32 %v589, %v618
        %v627 = vadd.f32 %v590, %v621
        %v628 = vadd.f32 %v591, %v623
        %v629 = vmax.f32 %v625, 0.0
        %v630 = vmax.f32 %v626, 0.0
        %v631 = vmax.f32 %v627, 0.0
        %v632 = vmax.f32 %v628, 0.0
        %v633 = vpack.c.bf16 %v629, %v629
        %v634 = vpack.c.bf16 %v630, %v630
        %v635 = vpack.c.bf16 %v631, %v631
        %v636 = vpack.c.bf16 %v632, %v632
        %s637 = smul.u32 %s195, 4
        %s638 = smul.addr %s637, 4
        %s639 = scalar_lea.vmem %s170, %s638
        %vm640 = vcmask 60416
        %641 = vst.msk [vmem:[%s639] sm:$0xf] %vm640, %v633
        %642 = vst.msk [vmem:[%s639 + $0x4] sm:$0xf] %vm640, %v634
        %643 = vst.msk [vmem:[%s639 + $0x8] sm:$0xf] %vm640, %v635
        %644 = vst.msk [vmem:[%s639 + $0xc] sm:$0xf] %vm640, %v636
      $region37: #{tpu_custom_call.1} parent=31 // loop_footer
        %s199 = sadd.s32 1, %s195
      $region38: #{tpu_custom_call.1} parent=31 // loop_footer_branch
        %194 = sbr.rel target = $region34
      $region39: #{tpu_custom_call.1} parent=31 // loop_exit
        _
      %p645 = scmp.lt.s32.totalorder %s14, 5
      %s646 = scalar_select %p645, %s14, 5
      %s647 = smul.addr %s646, 128
      %s648 = smul.addr %s647, 4
      %s649 = scalar_lea.vmem %s3, %s648
      // Predicated region
      $region40: #{tpu_custom_call.1} parent=31 // pred_check
        %p650 = pneg %p100
      $region41: #{tpu_custom_call.1} parent=31 // pred_check_branch
        %652 = sbr.rel (%p650) target = $region43
      $region42: #{tpu_custom_call.1} parent=31 // pred_region
        _
      $region43: #{tpu_custom_call.1} parent=31 // pred_fallthru
        _
    $region32: #{tpu_custom_call.1} parent=5 // pred_fallthru
      _
    %p653 = scmp.le.s32.totalorder 2, %s9
    // Predicated region
    $region44: #{tpu_custom_call.1} parent=5 // pred_check
      %p654 = pneg %p653
    $region45: #{tpu_custom_call.1} parent=5 // pred_check_branch
      %656 = sbr.rel (%p654) target = $region47
    $region46: #{tpu_custom_call.1} parent=5 // pred_region
      %s657 = ssub.s32 %s9, 2
      // Predicated region
      $region48: #{tpu_custom_call.1} parent=46 // pred_check
        %p658 = pneg %p106
      $region49: #{tpu_custom_call.1} parent=46 // pred_check_branch
        %660 = sbr.rel (%p658) target = $region51
      $region50: #{tpu_custom_call.1} parent=46 // pred_region
        %p661 = scmp.lt.s32.totalorder %s15, 5
        %s662 = scalar_select %p661, %s15, 5
        %s663 = smul.addr %s662, 128
        %s664 = smul.addr %s663, 4
        %s665 = scalar_lea.vmem %s3, %s664
      $region51: #{tpu_custom_call.1} parent=46 // pred_fallthru
        _
    $region47: #{tpu_custom_call.1} parent=5 // pred_fallthru
      _
  $region6: #{tpu_custom_call.1} parent=0 // loop_footer
    %s13 = sadd.s32 1, %s9
  $region7: #{tpu_custom_call.1} parent=0 // loop_footer_branch
    %8 = sbr.rel target = $region3
  $region8: #{tpu_custom_call.1} parent=0 // loop_exit
    _

</llo_original>
